<compile_context>
chip_gen: v5e
topology: v5e:2x2
jax: 0.10.0
libtpu: 0.0.40
codegen_flags: <defaults>
</compile_context>

<pallas_src>
import math
from functools import partial

import jax
import jax.numpy as jnp
from jax.experimental import pallas as pl
from jax.experimental.pallas import tpu as pltpu

N1 = 32            # coord_feat_dim
N2 = 12            # attr_feat_dim
NF = 16            # n_filters
NG = N2 * NF       # 192: flattened (j, f) groups
NW = NG + NF       # 208: fused width of [K12 | K1]


def _round_up(x, m):
    return ((x + m - 1) // m) * m


def outer_product_kernel(x1_ref, x2_ref, w1_ref, e_ref, s_ref, c_ref, k2_ref, b_ref, o_ref):
    # x1_ref: (tm, 32)   x2_ref: (tm, 12)
    # w1_ref: (32, 208) = [K12.reshape(32,192) | K1]
    # e_ref : (12, 208)  0/1 expansion: x2[:, j] -> lanes 16j..16j+15, zero tail
    # s_ref : (208, 16)  0/1 group-sum matrix (13 stacked identities)
    # c_ref : (1, 208)   zeros with ones in the last 16 lanes
    # k2_ref: (12, 16)   b_ref: (1, 16)   o_ref: (tm, 16)
    x1 = x1_ref[...]
    x2 = x2_ref[...]

    # y[:, 16j+f] = x1 . K12[:, j, f]  (j < 12);   y[:, 192+f] = x1 . K1[:, f]
    y = jnp.dot(x1, w1_ref[...], preferred_element_type=jnp.float32)        # (tm, 208)

    # g[:, 16j+f] = x2[:, j]  (j < 12);   g[:, 192+f] = 1
    g = jnp.dot(x2, e_ref[...], preferred_element_type=jnp.float32) + c_ref[...]

    z = y * g                                                               # (tm, 208)

    # Sum the 13 groups of 16 lanes -> outer-product term + x1 @ K1.
    acc = jnp.dot(z.astype(s_ref.dtype), s_ref[...],
                  preferred_element_type=jnp.float32)                       # (tm, 16)
    acc = acc + jnp.dot(x2, k2_ref[...], preferred_element_type=jnp.float32)
    acc = acc + b_ref[...]
    o_ref[...] = acc.astype(o_ref.dtype)


@partial(jax.jit, static_argnames=("tm",))
def outer_product_forward(first, second, kernel12, kernel1, kernel2, bias, *, tm=2048):
    """Pallas forward for Outer_Product (default config). Returns activity."""
    lead = first.shape[:-1]
    M = 1
    for d in lead:
        M *= d
    dtype = first.dtype

    x1 = first.reshape(M, N1)
    x2 = second.reshape(M, N2)

    # Fused / constant weights (tiny).
    w1 = jnp.concatenate([kernel12.reshape(N1, NG), kernel1], axis=1).astype(dtype)     # (32, 208)
    expand = jnp.concatenate(
        [jnp.kron(jnp.eye(N2, dtype=dtype), jnp.ones((1, NF), dtype=dtype)),
         jnp.zeros((N2, NF), dtype=dtype)], axis=1)                                      # (12, 208)
    gsum = jnp.tile(jnp.eye(NF, dtype=dtype), (N2 + 1, 1))                               # (208, 16)
    ctail = jnp.concatenate([jnp.zeros((1, NG), dtype=dtype),
                             jnp.ones((1, NF), dtype=dtype)], axis=1)                    # (1, 208)
    k2 = kernel2.astype(dtype)                                                           # (12, 16)
    b2 = bias.reshape(1, NF).astype(dtype)                                               # (1, 16)

    # Row tiling over the flattened leading dims.
    tm_eff = min(tm, _round_up(max(M, 1), 8))
    M_pad = _round_up(max(M, 1), tm_eff)
    if M_pad != M:
        x1 = jnp.pad(x1, ((0, M_pad - M), (0, 0)))
        x2 = jnp.pad(x2, ((0, M_pad - M), (0, 0)))

    out = pl.pallas_call(
        outer_product_kernel,
        out_shape=jax.ShapeDtypeStruct((M_pad, NF), dtype),
        grid_spec=pltpu.PrefetchScalarGridSpec(
            num_scalar_prefetch=0,
            grid=(M_pad // tm_eff,),
            in_specs=[
                pl.BlockSpec((tm_eff, N1), lambda i: (i, 0)),
                pl.BlockSpec((tm_eff, N2), lambda i: (i, 0)),
                pl.BlockSpec((N1, NW), lambda i: (0, 0)),
                pl.BlockSpec((N2, NW), lambda i: (0, 0)),
                pl.BlockSpec((NW, NF), lambda i: (0, 0)),
                pl.BlockSpec((1, NW), lambda i: (0, 0)),
                pl.BlockSpec((N2, NF), lambda i: (0, 0)),
                pl.BlockSpec((1, NF), lambda i: (0, 0)),
            ],
            out_specs=pl.BlockSpec((tm_eff, NF), lambda i: (i, 0)),
        ),
        compiler_params=pltpu.CompilerParams(
            dimension_semantics=("parallel",),
            vmem_limit_bytes=32 * 1024 * 1024,
        ),
    )(x1, x2, w1, expand, gsum, ctail, k2, b2)

    if M_pad != M:
        out = out[:M]
    return out.reshape(*lead, NF)


def compute_mask(masks):
    # sum_axis is None in the default config -> pass mask[0] through unchanged.
    return masks[0]


def reference_forward(first, second, kernel12, kernel1, kernel2, bias):
    outer = first[..., :, None] * second[..., None, :]            # (..., N1, N2)
    act = jnp.tensordot(outer, kernel12, axes=[[-2, -1], [0, 1]])
    act = act + jnp.matmul(first, kernel1)
    act = act + jnp.matmul(second, kernel2)
    act = act + bias.reshape((1,) * (first.ndim - 1) + (NF,))
    return act


if __name__ == "__main__":
    key = jax.random.PRNGKey(0)
    kx1, kx2, kw12, kw1, kw2, kx3, kx4 = jax.random.split(key, 7)

    # Deterministic synthetic parameters (matching the module's shapes/stddevs;
    # truncation of the normal init is omitted -- this is a synthetic kernel).
    kernel12 = jax.random.normal(kw12, (N1, N2, NF), dtype=jnp.float32) * (
        1.0 / math.sqrt(N1 * N2))
    kernel1 = jax.random.normal(kw1, (N1, NF), dtype=jnp.float32) * (
        1.0 / math.sqrt(N1))
    kernel2 = jax.random.normal(kw2, (N2, NF), dtype=jnp.float32) * (
        1.0 / math.sqrt(N2))
    bias = jnp.zeros((NF,), dtype=jnp.float32)

    # --- test 1: small, single-tile, tile-divisible row count ---
    B, L = 2, 8
    first = jax.random.normal(kx1, (B, L, N1), dtype=jnp.float32)
    second = jax.random.normal(kx2, (B, L, N2), dtype=jnp.float32)
    masks = (jnp.ones((B, L), dtype=jnp.float32),
             jnp.ones((B, L), dtype=jnp.float32))

    activity = outer_product_forward(first, second, kernel12, kernel1, kernel2, bias)
    out_mask = compute_mask(masks)
    activity = jax.block_until_ready(activity)
    out_mask = jax.block_until_ready(out_mask)

    ref = reference_forward(first, second, kernel12, kernel1, kernel2, bias)
    assert activity.shape == (B, L, NF)
    assert out_mask.shape == (B, L)
    assert jnp.allclose(activity, ref, atol=1e-4, rtol=1e-5)

    # --- test 2: ragged row count + multi-tile grid (exercises padding path) ---
    B2, L2 = 3, 50   # M = 150, not a multiple of the tile
    first2 = jax.random.normal(kx3, (B2, L2, N1), dtype=jnp.float32)
    second2 = jax.random.normal(kx4, (B2, L2, N2), dtype=jnp.float32)
    activity2 = outer_product_forward(
        first2, second2, kernel12, kernel1, kernel2, bias, tm=64)
    activity2 = jax.block_until_ready(activity2)
    ref2 = reference_forward(first2, second2, kernel12, kernel1, kernel2, bias)
    assert activity2.shape == (B2, L2, NF)
    assert jnp.allclose(activity2, ref2, atol=1e-4, rtol=1e-5)

    print("KERNEL_OK")
</pallas_src>

<mosaic_0001>
module attributes {stable_mosaic.version = 11 : i64} {
  func.func @outer_product_kernel(%arg0: i32, %arg1: memref<16x32xf32, #tpu.memory_space<vmem>>, %arg2: memref<16x12xf32, #tpu.memory_space<vmem>>, %arg3: memref<32x208xf32, #tpu.memory_space<vmem>>, %arg4: memref<12x208xf32, #tpu.memory_space<vmem>>, %arg5: memref<208x16xf32, #tpu.memory_space<vmem>>, %arg6: memref<1x208xf32, #tpu.memory_space<vmem>>, %arg7: memref<12x16xf32, #tpu.memory_space<vmem>>, %arg8: memref<1x16xf32, #tpu.memory_space<vmem>>, %arg9: memref<16x16xf32, #tpu.memory_space<vmem>>) attributes {dimension_semantics = [#tpu.dimension_semantics<parallel>], iteration_bounds = array<i64: 1>, scalar_prefetch = 0 : i64, scratch_operands = 0 : i64, tpu.core_type = #tpu.core_type<tc>, window_params = [{transform_indices = @transform_0, window_bounds = array<i64: 16, 32>}, {transform_indices = @transform_1, window_bounds = array<i64: 16, 12>}, {pipeline_mode = #tpu.pipeline_mode<synchronous>, transform_indices = @transform_2, window_bounds = array<i64: 32, 208>}, {pipeline_mode = #tpu.pipeline_mode<synchronous>, transform_indices = @transform_3, window_bounds = array<i64: 12, 208>}, {pipeline_mode = #tpu.pipeline_mode<synchronous>, transform_indices = @transform_4, window_bounds = array<i64: 208, 16>}, {pipeline_mode = #tpu.pipeline_mode<synchronous>, transform_indices = @transform_5, window_bounds = array<i64: 1, 208>}, {pipeline_mode = #tpu.pipeline_mode<synchronous>, transform_indices = @transform_6, window_bounds = array<i64: 12, 16>}, {pipeline_mode = #tpu.pipeline_mode<synchronous>, transform_indices = @transform_7, window_bounds = array<i64: 1, 16>}, {transform_indices = @transform_8, window_bounds = array<i64: 16, 16>}]} {
    %c0 = arith.constant 0 : index
    %c0_0 = arith.constant 0 : index
    %0 = vector.load %arg1[%c0, %c0_0] : memref<16x32xf32, #tpu.memory_space<vmem>>, vector<16x32xf32>
    %c0_1 = arith.constant 0 : index
    %c0_2 = arith.constant 0 : index
    %1 = vector.load %arg2[%c0_1, %c0_2] : memref<16x12xf32, #tpu.memory_space<vmem>>, vector<16x12xf32>
    %c0_3 = arith.constant 0 : index
    %c0_4 = arith.constant 0 : index
    %2 = vector.load %arg3[%c0_3, %c0_4] : memref<32x208xf32, #tpu.memory_space<vmem>>, vector<32x208xf32>
    %cst = arith.constant dense<0.000000e+00> : vector<16x208xf32>
    %3 = tpu.matmul %0, %2, %cst {dimension_numbers = #tpu.dot_dimension_numbers<[1], [0], [0], [1], [0, 0, 1, 1], [], []>} : vector<16x32xf32>, vector<32x208xf32>, vector<16x208xf32> -> vector<16x208xf32>
    %c0_5 = arith.constant 0 : index
    %c0_6 = arith.constant 0 : index
    %4 = vector.load %arg4[%c0_5, %c0_6] : memref<12x208xf32, #tpu.memory_space<vmem>>, vector<12x208xf32>
    %cst_7 = arith.constant dense<0.000000e+00> : vector<16x208xf32>
    %5 = tpu.matmul %1, %4, %cst_7 {dimension_numbers = #tpu.dot_dimension_numbers<[1], [0], [0], [1], [0, 0, 1, 1], [], []>} : vector<16x12xf32>, vector<12x208xf32>, vector<16x208xf32> -> vector<16x208xf32>
    %c0_8 = arith.constant 0 : index
    %c0_9 = arith.constant 0 : index
    %6 = vector.load %arg6[%c0_8, %c0_9] : memref<1x208xf32, #tpu.memory_space<vmem>>, vector<1x208xf32>
    %7 = vector.broadcast %6 : vector<1x208xf32> to vector<16x208xf32>
    %8 = arith.addf %5, %7 : vector<16x208xf32>
    %9 = arith.mulf %3, %8 : vector<16x208xf32>
    %c0_10 = arith.constant 0 : index
    %c0_11 = arith.constant 0 : index
    %10 = vector.load %arg5[%c0_10, %c0_11] : memref<208x16xf32, #tpu.memory_space<vmem>>, vector<208x16xf32>
    %cst_12 = arith.constant dense<0.000000e+00> : vector<16x16xf32>
    %11 = tpu.matmul %9, %10, %cst_12 {dimension_numbers = #tpu.dot_dimension_numbers<[1], [0], [0], [1], [0, 0, 1, 1], [], []>} : vector<16x208xf32>, vector<208x16xf32>, vector<16x16xf32> -> vector<16x16xf32>
    %c0_13 = arith.constant 0 : index
    %c0_14 = arith.constant 0 : index
    %12 = vector.load %arg7[%c0_13, %c0_14] : memref<12x16xf32, #tpu.memory_space<vmem>>, vector<12x16xf32>
    %cst_15 = arith.constant dense<0.000000e+00> : vector<16x16xf32>
    %13 = tpu.matmul %1, %12, %cst_15 {dimension_numbers = #tpu.dot_dimension_numbers<[1], [0], [0], [1], [0, 0, 1, 1], [], []>} : vector<16x12xf32>, vector<12x16xf32>, vector<16x16xf32> -> vector<16x16xf32>
    %14 = arith.addf %11, %13 : vector<16x16xf32>
    %c0_16 = arith.constant 0 : index
    %c0_17 = arith.constant 0 : index
    %15 = vector.load %arg8[%c0_16, %c0_17] : memref<1x16xf32, #tpu.memory_space<vmem>>, vector<1x16xf32>
    %16 = vector.broadcast %15 : vector<1x16xf32> to vector<16x16xf32>
    %17 = arith.addf %14, %16 : vector<16x16xf32>
    %c0_18 = arith.constant 0 : index
    %c0_19 = arith.constant 0 : index
    %18 = vector.load %arg9[%c0_18, %c0_19] : memref<16x16xf32, #tpu.memory_space<vmem>>, vector<16x16xf32>
    tpu.vector_store %arg9[%c0_18, %c0_19], %17 {strides = array<i32>} : memref<16x16xf32, #tpu.memory_space<vmem>>, vector<16x16xf32>,
    return
  }
  func.func @transform_0(%arg0: i32) -> (i32, i32) {
    %c0_i32 = arith.constant 0 : i32
    %c0_i32_0 = arith.constant 0 : i32
    return %arg0, %c0_i32 : i32, i32
  }
  func.func @transform_1(%arg0: i32) -> (i32, i32) {
    %c0_i32 = arith.constant 0 : i32
    %c0_i32_0 = arith.constant 0 : i32
    return %arg0, %c0_i32 : i32, i32
  }
  func.func @transform_2(%arg0: i32) -> (i32, i32) {
    %c0_i32 = arith.constant 0 : i32
    %c0_i32_0 = arith.constant 0 : i32
    %c0_i32_1 = arith.constant 0 : i32
    return %c0_i32, %c0_i32_0 : i32, i32
  }
  func.func @transform_3(%arg0: i32) -> (i32, i32) {
    %c0_i32 = arith.constant 0 : i32
    %c0_i32_0 = arith.constant 0 : i32
    %c0_i32_1 = arith.constant 0 : i32
    return %c0_i32, %c0_i32_0 : i32, i32
  }
  func.func @transform_4(%arg0: i32) -> (i32, i32) {
    %c0_i32 = arith.constant 0 : i32
    %c0_i32_0 = arith.constant 0 : i32
    %c0_i32_1 = arith.constant 0 : i32
    return %c0_i32, %c0_i32_0 : i32, i32
  }
  func.func @transform_5(%arg0: i32) -> (i32, i32) {
    %c0_i32 = arith.constant 0 : i32
    %c0_i32_0 = arith.constant 0 : i32
    %c0_i32_1 = arith.constant 0 : i32
    return %c0_i32, %c0_i32_0 : i32, i32
  }
  func.func @transform_6(%arg0: i32) -> (i32, i32) {
    %c0_i32 = arith.constant 0 : i32
    %c0_i32_0 = arith.constant 0 : i32
    %c0_i32_1 = arith.constant 0 : i32
    return %c0_i32, %c0_i32_0 : i32, i32
  }
  func.func @transform_7(%arg0: i32) -> (i32, i32) {
    %c0_i32 = arith.constant 0 : i32
    %c0_i32_0 = arith.constant 0 : i32
    %c0_i32_1 = arith.constant 0 : i32
    return %c0_i32, %c0_i32_0 : i32, i32
  }
  func.func @transform_8(%arg0: i32) -> (i32, i32) {
    %c0_i32 = arith.constant 0 : i32
    %c0_i32_0 = arith.constant 0 : i32
    return %arg0, %c0_i32 : i32, i32
  }
}

</mosaic_0001>

<llo_original>
// kernel: outer_product_forward.1
$region0: #{outer_product_forward.1}
  #allocation0 [shape = 'u32[]', space=smem, size = 0x4, offset = 0x4, fixed_abs, tag = 'smem constant byte address 0x4 - core index']
  #allocation1 [shape = 'u32[72,128]{1,0:T(1,128)}', space=vmem, size = 0x9000, scoped, tag = 'internal scratch']
  %s0 = inlined_call_operand.vmem [shape: f32[16,32], index: 0, kind: input, shape index: {}]
  %s1 = inlined_call_operand.vmem [shape: f32[16,12], index: 1, kind: input, shape index: {}]
  %s2 = inlined_call_operand.vmem [shape: f32[32,208], index: 2, kind: input, shape index: {}]
  %s3 = inlined_call_operand.vmem [shape: f32[12,208], index: 3, kind: input, shape index: {}]
  %s4 = inlined_call_operand.vmem [shape: f32[208,16], index: 4, kind: input, shape index: {}]
  %s5 = inlined_call_operand.vmem [shape: f32[1,208], index: 5, kind: input, shape index: {}]
  %s6 = inlined_call_operand.vmem [shape: f32[12,16], index: 6, kind: input, shape index: {}]
  %s7 = inlined_call_operand.vmem [shape: f32[1,16], index: 7, kind: input, shape index: {}]
  %s8 = inlined_call_operand.hbm [shape: f32[16,16], index: 8, kind: output, shape index: {}]
  %s9 = sld [smem:[#allocation0]]
  $region42: #{outer_product_forward.1} parent=0
    _
  %s11 = ssub.s32 1, %s9
  %s12 = scalar_select 0, %s11, %s9
  $region1: #{outer_product_forward.1} parent=0
    #allocation2 [shape = 'u8[8192]{0}', space=vmem, size = 0x2000, scoped, tag = 'output window, operand 0, single buffered']
    #allocation3 [shape = 's32[1]{0}', space=sflag, size = 0x4, scoped, tag = 'scoped memory for outer_product_forward.1']
    %13 = vsyncpa [#allocation3], 0
    // Predicated region
    $region2: #{outer_product_forward.1} parent=1 // pred_check
      _
    $region3: #{outer_product_forward.1} parent=1 // pred_check_branch
      %15 = sbr.rel (0) target = $region5
    $region4: #{outer_product_forward.1} parent=1 // pred_region
      _
    $region5: #{outer_product_forward.1} parent=1 // pred_fallthru
      _
    // Predicated region
    $region6: #{outer_product_forward.1} parent=1 // pred_check
      _
    $region7: #{outer_product_forward.1} parent=1 // pred_check_branch
      %17 = sbr.rel (0) target = $region9
    $region8: #{outer_product_forward.1} parent=1 // pred_region
      _
    $region9: #{outer_product_forward.1} parent=1 // pred_fallthru
      _
    // Predicated region
    $region10: #{outer_product_forward.1} parent=1 // pred_check
      _
    $region11: #{outer_product_forward.1} parent=1 // pred_check_branch
      %19 = sbr.rel (0) target = $region13
    $region12: #{outer_product_forward.1} parent=1 // pred_region
      _
    $region13: #{outer_product_forward.1} parent=1 // pred_fallthru
      _
    // Predicated region
    $region14: #{outer_product_forward.1} parent=1 // pred_check
      _
    $region15: #{outer_product_forward.1} parent=1 // pred_check_branch
      %21 = sbr.rel (0) target = $region17
    $region16: #{outer_product_forward.1} parent=1 // pred_region
      _
    $region17: #{outer_product_forward.1} parent=1 // pred_fallthru
      _
    // Predicated region
    $region18: #{outer_product_forward.1} parent=1 // pred_check
      _
    $region19: #{outer_product_forward.1} parent=1 // pred_check_branch
      %23 = sbr.rel (0) target = $region21
    $region20: #{outer_product_forward.1} parent=1 // pred_region
      _
    $region21: #{outer_product_forward.1} parent=1 // pred_fallthru
      _
    // Predicated region
    $region22: #{outer_product_forward.1} parent=1 // pred_check
      _
    $region23: #{outer_product_forward.1} parent=1 // pred_check_branch
      %25 = sbr.rel (0) target = $region25
    $region24: #{outer_product_forward.1} parent=1 // pred_region
      _
    $region25: #{outer_product_forward.1} parent=1 // pred_fallthru
      _
    // Predicated region
    $region26: #{outer_product_forward.1} parent=1 // pred_check
      _
    $region27: #{outer_product_forward.1} parent=1 // pred_check_branch
      %27 = sbr.rel (0) target = $region29
    $region28: #{outer_product_forward.1} parent=1 // pred_region
      _
    $region29: #{outer_product_forward.1} parent=1 // pred_fallthru
      _
    // Predicated region
    $region30: #{outer_product_forward.1} parent=1 // pred_check
      _
    $region31: #{outer_product_forward.1} parent=1 // pred_check_branch
      %29 = sbr.rel (0) target = $region33
    $region32: #{outer_product_forward.1} parent=1 // pred_region
      _
    $region33: #{outer_product_forward.1} parent=1 // pred_fallthru
      _
    %v30 = vld [vmem:[%s0] sm:$0xff]
    %v31 = vld [vmem:[%s0 + $0x8] sm:$0xff]
    %v32 = vld [vmem:[%s1] sm:$0xff]
    %v33 = vld [vmem:[%s1 + $0x8] sm:$0xff]
    %v34 = vld [vmem:[%s2] sm:$0xff]
    %v35 = vld [vmem:[%s2 + $0x8] sm:$0xff]
    %v36 = vld [vmem:[%s2 + $0x10] sm:$0xff]
    %v37 = vld [vmem:[%s2 + $0x18] sm:$0xff]
    %v38 = vld [vmem:[%s2 + $0x20] sm:$0xff]
    %v39 = vld [vmem:[%s2 + $0x28] sm:$0xff]
    %v40 = vld [vmem:[%s2 + $0x30] sm:$0xff]
    %v41 = vld [vmem:[%s2 + $0x38] sm:$0xff]
    %vm42 = vcmask 261120
    %v44 = vsel %vm42, %v30, 0
    %v47 = vsel %vm42, %v31, 0
    %49 = vmatpush.msra.mxu0 0.0
    %50 = vmatpush.msra.mxu0 0.0
    %51 = vmatpush.msra.mxu0 0.0
    %52 = vmatpush.msra.mxu0 0.0
    %53 = vmatpush.msra.mxu0 0.0
    %54 = vmatpush.msra.mxu0 0.0
    %55 = vmatpush.msra.mxu0 0.0
    %56 = vmatpush.msra.mxu0 0.0
    %57 = vmatpush.msra.mxu0 0.0
    %58 = vmatpush.msra.mxu0 0.0
    %59 = vmatpush.msra.mxu0 0.0
    %60 = vmatpush.msra.mxu0 0.0
    %61 = vmatpush.msra.mxu0 %v40
    %62 = vmatpush.msra.mxu0 %v38
    %63 = vmatpush.msra.mxu0 %v36
    %64 = vmatpush.msra.mxu0 %v34
    %65 = vmatmul.f32.gmra.mxu0 %v44
    %v66 = vpop.f32.mrf.mxu0
    %v67 = vadd.f32 0.0, %v66
    %68 = vmatmul.f32.gmra.mxu0 %v47
    %v69 = vpop.f32.mrf.mxu0
    %v70 = vadd.f32 0.0, %v69
    %71 = vdwg.mxu0
    %72 = vmatpush.msra.mxu0 0.0
    %73 = vmatpush.msra.mxu0 0.0
    %74 = vmatpush.msra.mxu0 0.0
    %75 = vmatpush.msra.mxu0 0.0
    %76 = vmatpush.msra.mxu0 0.0
    %77 = vmatpush.msra.mxu0 0.0
    %78 = vmatpush.msra.mxu0 0.0
    %79 = vmatpush.msra.mxu0 0.0
    %80 = vmatpush.msra.mxu0 0.0
    %81 = vmatpush.msra.mxu0 0.0
    %82 = vmatpush.msra.mxu0 0.0
    %83 = vmatpush.msra.mxu0 0.0
    %84 = vmatpush.msra.mxu0 %v41
    %85 = vmatpush.msra.mxu0 %v39
    %86 = vmatpush.msra.mxu0 %v37
    %87 = vmatpush.msra.mxu0 %v35
    %88 = vmatmul.f32.gmra.mxu0 %v44
    %v89 = vpop.f32.mrf.mxu0
    %v90 = vadd.f32 0.0, %v89
    %91 = vmatmul.f32.gmra.mxu0 %v47
    %v92 = vpop.f32.mrf.mxu0
    %v93 = vadd.f32 0.0, %v92
    %94 = vdwg.mxu0
    %v95 = vld [vmem:[%s3] sm:$0xff]
    %v96 = vld [vmem:[%s3 + $0x8] sm:$0xff]
    %v97 = vld [vmem:[%s3 + $0x10] sm:$0xf]
    %v98 = vld [vmem:[%s3 + $0x18] sm:$0xf]
    %v99 = vld [vmem:[%s5] sm:$0x3]
    %v101 = vperm.slane %v99, 0
    %v102 = vperm.slane %v99, 1
    %vm105 = vcmask 97280
    %v107 = vsel %vm105, %v32, 0
    %v110 = vsel %vm105, %v33, 0
    %vm112 = vcmask 1043456
    %v114 = vsel %vm112, %v97, 0
    %v117 = vsel %vm112, %v98, 0
    %119 = vmatpush.msra.mxu0 0.0
    %120 = vmatpush.msra.mxu0 0.0
    %121 = vmatpush.msra.mxu0 0.0
    %122 = vmatpush.msra.mxu0 0.0
    %123 = vmatpush.msra.mxu0 0.0
    %124 = vmatpush.msra.mxu0 0.0
    %125 = vmatpush.msra.mxu0 0.0
    %126 = vmatpush.msra.mxu0 0.0
    %127 = vmatpush.msra.mxu0 0.0
    %128 = vmatpush.msra.mxu0 0.0
    %129 = vmatpush.msra.mxu0 0.0
    %130 = vmatpush.msra.mxu0 0.0
    %131 = vmatpush.msra.mxu0 0.0
    %132 = vmatpush.msra.mxu0 0.0
    %133 = vmatpush.msra.mxu0 %v114
    %134 = vmatpush.msra.mxu0 %v95
    %135 = vmatmul.f32.gmra.mxu0 %v107
    %v136 = vpop.f32.mrf.mxu0
    %v137 = vadd.f32 %v101, %v136
    %138 = vmatmul.f32.gmra.mxu0 %v110
    %v139 = vpop.f32.mrf.mxu0
    %v140 = vadd.f32 %v101, %v139
    %141 = vdwg.mxu0
    %142 = vmatpush.msra.mxu0 0.0
    %143 = vmatpush.msra.mxu0 0.0
    %144 = vmatpush.msra.mxu0 0.0
    %145 = vmatpush.msra.mxu0 0.0
    %146 = vmatpush.msra.mxu0 0.0
    %147 = vmatpush.msra.mxu0 0.0
    %148 = vmatpush.msra.mxu0 0.0
    %149 = vmatpush.msra.mxu0 0.0
    %150 = vmatpush.msra.mxu0 0.0
    %151 = vmatpush.msra.mxu0 0.0
    %152 = vmatpush.msra.mxu0 0.0
    %153 = vmatpush.msra.mxu0 0.0
    %154 = vmatpush.msra.mxu0 0.0
    %155 = vmatpush.msra.mxu0 0.0
    %156 = vmatpush.msra.mxu0 %v117
    %157 = vmatpush.msra.mxu0 %v96
    %158 = vmatmul.f32.gmra.mxu0 %v107
    %v159 = vpop.f32.mrf.mxu0
    %v160 = vadd.f32 %v102, %v159
    %161 = vmatmul.f32.gmra.mxu0 %v110
    %v162 = vpop.f32.mrf.mxu0
    %v163 = vadd.f32 %v102, %v162
    %164 = vdwg.mxu0
    %v165 = vmul.f32 %v67, %v137
    %v166 = vmul.f32 %v90, %v160
    %v167 = vmul.f32 %v70, %v140
    %v168 = vmul.f32 %v93, %v163
    %v169 = vld [vmem:[%s4] sm:$0xff]
    %v170 = vld [vmem:[%s4 + $0x8] sm:$0xff]
    %v171 = vld [vmem:[%s4 + $0x10] sm:$0xff]
    %v172 = vld [vmem:[%s4 + $0x18] sm:$0xff]
    %v173 = vld [vmem:[%s4 + $0x20] sm:$0xff]
    %v174 = vld [vmem:[%s4 + $0x28] sm:$0xff]
    %v175 = vld [vmem:[%s4 + $0x30] sm:$0xff]
    %v176 = vld [vmem:[%s4 + $0x38] sm:$0xff]
    %v177 = vld [vmem:[%s4 + $0x40] sm:$0xff]
    %v178 = vld [vmem:[%s4 + $0x48] sm:$0xff]
    %v179 = vld [vmem:[%s4 + $0x50] sm:$0xff]
    %v180 = vld [vmem:[%s4 + $0x58] sm:$0xff]
    %v181 = vld [vmem:[%s4 + $0x60] sm:$0xff]
    %v182 = vld [vmem:[%s4 + $0x68] sm:$0xff]
    %v183 = vld [vmem:[%s4 + $0x70] sm:$0xff]
    %v184 = vld [vmem:[%s4 + $0x78] sm:$0xff]
    %v185 = vld [vmem:[%s4 + $0x80] sm:$0xff]
    %v186 = vld [vmem:[%s4 + $0x88] sm:$0xff]
    %v187 = vld [vmem:[%s4 + $0x90] sm:$0xff]
    %v188 = vld [vmem:[%s4 + $0x98] sm:$0xff]
    %v189 = vld [vmem:[%s4 + $0xa0] sm:$0xff]
    %v190 = vld [vmem:[%s4 + $0xa8] sm:$0xff]
    %v191 = vld [vmem:[%s4 + $0xb0] sm:$0xff]
    %v192 = vld [vmem:[%s4 + $0xb8] sm:$0xff]
    %v193 = vld [vmem:[%s4 + $0xc0] sm:$0xff]
    %v194 = vld [vmem:[%s4 + $0xc8] sm:$0xff]
    %v195 = vld [vmem:[%s6] sm:$0xff]
    %v196 = vld [vmem:[%s6 + $0x8] sm:$0xf]
    %v198 = vsel %vm112, %v196, 0
    %200 = vmatpush.msra.mxu0 0.0
    %201 = vmatpush.msra.mxu0 0.0
    %202 = vmatpush.msra.mxu0 0.0
    %203 = vmatpush.msra.mxu0 0.0
    %204 = vmatpush.msra.mxu0 0.0
    %205 = vmatpush.msra.mxu0 0.0
    %206 = vmatpush.msra.mxu0 0.0
    %207 = vmatpush.msra.mxu0 0.0
    %208 = vmatpush.msra.mxu0 0.0
    %209 = vmatpush.msra.mxu0 0.0
    %210 = vmatpush.msra.mxu0 0.0
    %211 = vmatpush.msra.mxu0 0.0
    %212 = vmatpush.msra.mxu0 0.0
    %213 = vmatpush.msra.mxu0 0.0
    %214 = vmatpush.msra.mxu0 %v198
    %215 = vmatpush.msra.mxu0 %v195
    %216 = vmatmul.f32.gmra.mxu0 %v107
    %v217 = vpop.f32.mrf.mxu0
    %v218 = vadd.f32 0.0, %v217
    %219 = vmatmul.f32.gmra.mxu0 %v110
    %v220 = vpop.f32.mrf.mxu0
    %v221 = vadd.f32 0.0, %v220
    %222 = vdwg.mxu0
    %vm223 = vcmask 654336
    %v225 = vsel %vm223, %v166, 0
    %v228 = vsel %vm223, %v168, 0
    %230 = vmatpush.msra.mxu0 %v184
    %231 = vmatpush.msra.mxu0 %v183
    %232 = vmatpush.msra.mxu0 %v182
    %233 = vmatpush.msra.mxu0 %v181
    %234 = vmatpush.msra.mxu0 %v180
    %235 = vmatpush.msra.mxu0 %v179
    %236 = vmatpush.msra.mxu0 %v178
    %237 = vmatpush.msra.mxu0 %v177
    %238 = vmatpush.msra.mxu0 %v176
    %239 = vmatpush.msra.mxu0 %v175
    %240 = vmatpush.msra.mxu0 %v174
    %241 = vmatpush.msra.mxu0 %v173
    %242 = vmatpush.msra.mxu0 %v172
    %243 = vmatpush.msra.mxu0 %v171
    %244 = vmatpush.msra.mxu0 %v170
    %245 = vmatpush.msra.mxu0 %v169
    %246 = vmatmul.f32.gmra.mxu0 %v165
    %v247 = vpop.f32.mrf.mxu0
    %v248 = vadd.f32 %v218, %v247
    %249 = vmatmul.f32.gmra.mxu0 %v167
    %v250 = vpop.f32.mrf.mxu0
    %v251 = vadd.f32 %v221, %v250
    %252 = vdwg.mxu0
    %253 = vmatpush.msra.mxu0 0.0
    %254 = vmatpush.msra.mxu0 0.0
    %255 = vmatpush.msra.mxu0 0.0
    %256 = vmatpush.msra.mxu0 0.0
    %257 = vmatpush.msra.mxu0 0.0
    %258 = vmatpush.msra.mxu0 0.0
    %259 = vmatpush.msra.mxu0 %v194
    %260 = vmatpush.msra.mxu0 %v193
    %261 = vmatpush.msra.mxu0 %v192
    %262 = vmatpush.msra.mxu0 %v191
    %263 = vmatpush.msra.mxu0 %v190
    %264 = vmatpush.msra.mxu0 %v189
    %265 = vmatpush.msra.mxu0 %v188
    %266 = vmatpush.msra.mxu0 %v187
    %267 = vmatpush.msra.mxu0 %v186
    %268 = vmatpush.msra.mxu0 %v185
    %269 = vmatmul.f32.gmra.mxu0 %v225
    %v270 = vpop.f32.mrf.mxu0
    %v271 = vadd.f32 %v248, %v270
    %272 = vmatmul.f32.gmra.mxu0 %v228
    %v273 = vpop.f32.mrf.mxu0
    %v274 = vadd.f32 %v251, %v273
    %275 = vdwg.mxu0
    %v276 = vld [vmem:[%s7] sm:$0x1]
    %v278 = vperm.slane %v276, 0
    %v280 = vadd.f32 %v271, %v278
    %v281 = vadd.f32 %v274, %v278
    %vm282 = vcmask 130048
    %283 = vst.msk [vmem:[#allocation2] sm:$0xff] %vm282, %v280
    %284 = vst.msk [vmem:[#allocation2 + $0x8] sm:$0xff] %vm282, %v281
    // Predicated region
    $region34: #{outer_product_forward.1} parent=1 // pred_check
      _
    $region35: #{outer_product_forward.1} parent=1 // pred_check_branch
      %286 = sbr.rel (0) target = $region37
    $region36: #{outer_product_forward.1} parent=1 // pred_region
      %288 = vsyncadd [#allocation3], 0
      %s289 = sshll.u32 [#allocation2], 4
      %s290 = int_to_ptr.vmem [resolvable:$true] %s289
      %s291 = sshll.u32 %s8, 4
      %s292 = int_to_ptr.hbm [resolvable:$true] %s291
      %297 = dma.vmem_to_hbm [thread:$0]  %s290, 256, %s292, [#allocation3], 128, 128, 8
    $region37: #{outer_product_forward.1} parent=1 // pred_fallthru
      _
    // Predicated region
    $region38: #{outer_product_forward.1} parent=1 // pred_check
      _
    $region39: #{outer_product_forward.1} parent=1 // pred_check_branch
      %299 = sbr.rel (0) target = $region41
    $region40: #{outer_product_forward.1} parent=1 // pred_region
      %301 = dma.done [#allocation3], 256
    $region41: #{outer_product_forward.1} parent=1 // pred_fallthru
      _
    %302 = vsyncpa [#allocation3], 1

</llo_original>
